<compile_context>
chip_gen: v6e
topology: v6e:2x2x1
jax: 0.10.0
libtpu: 0.0.40
codegen_flags: <defaults>
</compile_context>

<pallas_src>
import functools

import jax
import jax.numpy as jnp
from jax.experimental import pallas as pl
from jax.experimental.pallas import tpu as pltpu


def _cdiv(a, b):
    return -(-a // b)


def _round_up(x, m):
    return _cdiv(x, m) * m


def _value_net_kernel(x_ref, w1_ref, b1_ref, w2_ref, b2_ref, w3_ref, b3_ref, o_ref):
    # x_ref : (S, TB)  state tile, batch on lanes (f32 in HBM/VMEM)
    # w1    : (L1, S)  bf16      b1 : (L1, 1) f32
    # w2    : (L2, L1) bf16      b2 : (L2, 1) f32
    # w3    : (L2, 1)  f32       b3 : (1, 1)  f32 scalar in SMEM
    # o_ref : (1, TB)  lane-dense output slab (batch on lanes)
    x = x_ref[...].astype(jnp.bfloat16)

    # Layer 1 (MXU, plain NN): (L1, S) @ (S, TB) -> (L1, TB), f32 accumulate.
    h1 = jnp.dot(w1_ref[...], x, preferred_element_type=jnp.float32)
    h1 = jnp.maximum(h1 + b1_ref[...], 0.0)           # f32 column-bias + ReLU (VPU)

    # Layer 2 (MXU): (L2, L1) @ (L1, TB) -> (L2, TB), bf16 operands, f32 accumulate.
    h2 = jnp.dot(w2_ref[...], h1.astype(jnp.bfloat16), preferred_element_type=jnp.float32)
    h2 = jnp.maximum(h2 + b2_ref[...], 0.0)

    # Layer 3 (L2 -> 1): f32 VPU multiply + sublane (XLU) reduce -- no tiny MXU matmul.
    out = jnp.sum(h2 * w3_ref[...], axis=0, keepdims=True)        # (1, TB)
    o_ref[...] = (out + b3_ref[0, 0]).astype(o_ref.dtype)


@functools.partial(jax.jit, static_argnames=("batch_tile",))
def value_network_forward(state, params, batch_tile=8192):
    """Fused forward pass of ValueNetwork.

    state : (B, state_dim) float32
    params: dict with PyTorch-layout weights:
        w1 (L1, S), b1 (L1, 1), w2 (L2, L1), b2 (L2, 1), w3 (L2, 1), b3 (1, 1)
        (w3 is linear3.weight transposed to a column.)
    returns (B, 1) float32
    """
    B, S = state.shape
    w1, b1 = params["w1"], params["b1"]
    w2, b2 = params["w2"], params["b2"]
    w3, b3 = params["w3"], params["b3"]
    L1, L2 = w1.shape[0], w2.shape[0]

    # bf16 MXU operands (weights cast once, resident); epilogue stays f32.
    w1 = w1.astype(jnp.bfloat16)
    w2 = w2.astype(jnp.bfloat16)
    b1 = b1.astype(jnp.float32)
    b2 = b2.astype(jnp.float32)
    w3 = w3.astype(jnp.float32)
    b3 = b3.astype(jnp.float32)

    # Tile selection: lane-aligned TB, low padding waste, >=2 grid steps when
    # possible so v7x's two TensorCores both get work via the "parallel" axis.
    n_steps = max(2, _cdiv(B, batch_tile))
    TB = min(batch_tile, _round_up(_cdiv(B, n_steps), 128))
    B_pad = _round_up(B, TB)
    grid = (B_pad // TB,)

    # Batch on lanes: transpose once in the wrapper -> dense (S, B_pad) slab.
    if B_pad != B:
        state = jnp.pad(state, ((0, B_pad - B), (0, 0)))
    state_t = state.T  # (S, B_pad)

    def resident(shape):
        # Constant block index -> stays resident in VMEM across grid steps.
        return pl.BlockSpec(shape, lambda i: (0, 0))

    flops = 2 * B_pad * (S * L1 + L1 * L2 + L2)
    bytes_accessed = (
        state_t.size * state_t.dtype.itemsize
        + w1.size * 2 + w2.size * 2
        + (b1.size + b2.size + w3.size + b3.size) * 4
        + B_pad * 4
    )

    out = pl.pallas_call(
        _value_net_kernel,
        out_shape=jax.ShapeDtypeStruct((1, B_pad), jnp.float32),
        grid=grid,
        in_specs=[
            pl.BlockSpec((S, TB), lambda i: (0, i)),                # streamed state tile
            resident(w1.shape), resident(b1.shape),                 # resident weights
            resident(w2.shape), resident(b2.shape),
            resident(w3.shape),
            pl.BlockSpec((1, 1), lambda i: (0, 0), memory_space=pltpu.SMEM),  # b3 scalar
        ],
        out_specs=pl.BlockSpec((1, TB), lambda i: (0, i)),          # lane-dense output
        compiler_params=pltpu.CompilerParams(
            dimension_semantics=("parallel",),
            vmem_limit_bytes=16 * 1024 * 1024,
        ),
        cost_estimate=pl.CostEstimate(
            flops=flops, transcendentals=0, bytes_accessed=bytes_accessed),
    )(state_t, w1, b1, w2, b2, w3, b3)

    return out[0, :B].reshape(B, 1)


def init_value_network_params(key, state_dim, l1_dim, l2_dim, init_w=0.003):
    """PyTorch-equivalent init.

    linear1/linear2: U(-1/sqrt(fan_in), 1/sqrt(fan_in)) for weight and bias.
    linear3: weight and bias U(-init_w, init_w).
    Weights use PyTorch (out_features, in_features) layout; biases are columns.
    """
    k1, k2, k3, k4, k5, k6 = jax.random.split(key, 6)

    def lin_init(kw, kb, fan_in, fan_out):
        bound = 1.0 / (fan_in ** 0.5)
        w = jax.random.uniform(kw, (fan_out, fan_in), jnp.float32, -bound, bound)
        b = jax.random.uniform(kb, (fan_out, 1), jnp.float32, -bound, bound)
        return w, b

    w1, b1 = lin_init(k1, k2, state_dim, l1_dim)
    w2, b2 = lin_init(k3, k4, l1_dim, l2_dim)
    w3 = jax.random.uniform(k5, (l2_dim, 1), jnp.float32, -init_w, init_w)
    b3 = jax.random.uniform(k6, (1, 1), jnp.float32, -init_w, init_w)
    return {"w1": w1, "b1": b1, "w2": w2, "b2": b2, "w3": w3, "b3": b3}


if __name__ == "__main__":
    key = jax.random.PRNGKey(0)
    k_param, k_state = jax.random.split(key)

    # Small shapes consistent with the module: state_dim=8, l1_dim=32, l2_dim=32, batch=8.
    B, state_dim, l1_dim, l2_dim = 8, 8, 32, 32

    params = init_value_network_params(k_param, state_dim, l1_dim, l2_dim, init_w=0.003)
    state = jax.random.normal(k_state, (B, state_dim), jnp.float32)

    out = value_network_forward(state, params)
    out = jax.block_until_ready(out)

    # Pure-JAX f32 reference (same math, PyTorch layout).  Kernel uses bf16 MXU
    # operands with f32 accumulation, so tolerance is bf16-level.
    h1 = jnp.maximum(state @ params["w1"].T + params["b1"].T, 0.0)
    h2 = jnp.maximum(h1 @ params["w2"].T + params["b2"].T, 0.0)
    ref = h2 @ params["w3"] + params["b3"]

    assert out.shape == (B, 1)
    assert jnp.allclose(out, ref, atol=5e-3, rtol=5e-2), \
        f"max abs err {jnp.max(jnp.abs(out - ref))}"

    print("KERNEL_OK")
</pallas_src>

<mosaic_0001>
module attributes {stable_mosaic.version = 11 : i64} {
  func.func @_value_net_kernel(%arg0: i32, %arg1: memref<8x128xf32, #tpu.memory_space<vmem>>, %arg2: memref<32x8xbf16, #tpu.memory_space<vmem>>, %arg3: memref<32x1xf32, #tpu.memory_space<vmem>>, %arg4: memref<32x32xbf16, #tpu.memory_space<vmem>>, %arg5: memref<32x1xf32, #tpu.memory_space<vmem>>, %arg6: memref<32x1xf32, #tpu.memory_space<vmem>>, %arg7: memref<1x1xf32, #tpu.memory_space<smem>>, %arg8: memref<1x128xf32, #tpu.memory_space<vmem>>) attributes {dimension_semantics = [#tpu.dimension_semantics<parallel>], iteration_bounds = array<i64: 1>, scalar_prefetch = 0 : i64, scratch_operands = 0 : i64, tpu.core_type = #tpu.core_type<tc>, window_params = [{transform_indices = @transform_0, window_bounds = array<i64: 8, 128>}, {pipeline_mode = #tpu.pipeline_mode<synchronous>, transform_indices = @transform_1, window_bounds = array<i64: 32, 8>}, {pipeline_mode = #tpu.pipeline_mode<synchronous>, transform_indices = @transform_2, window_bounds = array<i64: 32, 1>}, {pipeline_mode = #tpu.pipeline_mode<synchronous>, transform_indices = @transform_3, window_bounds = array<i64: 32, 32>}, {pipeline_mode = #tpu.pipeline_mode<synchronous>, transform_indices = @transform_4, window_bounds = array<i64: 32, 1>}, {pipeline_mode = #tpu.pipeline_mode<synchronous>, transform_indices = @transform_5, window_bounds = array<i64: 32, 1>}, {transform_indices = @transform_6, window_bounds = array<i64: 1, 1>}, {transform_indices = @transform_7, window_bounds = array<i64: 1, 128>}]} {
    %c0 = arith.constant 0 : index
    %c0_0 = arith.constant 0 : index
    %0 = vector.load %arg1[%c0, %c0_0] : memref<8x128xf32, #tpu.memory_space<vmem>>, vector<8x128xf32>
    %1 = arith.truncf %0 : vector<8x128xf32> to vector<8x128xbf16>
    %c0_1 = arith.constant 0 : index
    %c0_2 = arith.constant 0 : index
    %2 = vector.load %arg2[%c0_1, %c0_2] : memref<32x8xbf16, #tpu.memory_space<vmem>>, vector<32x8xbf16>
    %cst = arith.constant dense<0.000000e+00> : vector<32x128xf32>
    %3 = tpu.matmul %2, %1, %cst {dimension_numbers = #tpu.dot_dimension_numbers<[1], [0], [0], [1], [0, 0, 1, 1], [], []>} : vector<32x8xbf16>, vector<8x128xbf16>, vector<32x128xf32> -> vector<32x128xf32>
    %c0_3 = arith.constant 0 : index
    %c0_4 = arith.constant 0 : index
    %4 = vector.load %arg3[%c0_3, %c0_4] : memref<32x1xf32, #tpu.memory_space<vmem>>, vector<32x1xf32>
    %5 = vector.broadcast %4 : vector<32x1xf32> to vector<32x128xf32>
    %6 = arith.addf %3, %5 : vector<32x128xf32>
    %cst_5 = arith.constant 0.000000e+00 : f32
    %7 = vector.broadcast %cst_5 : f32 to vector<32x128xf32>
    %8 = arith.maximumf %6, %7 : vector<32x128xf32>
    %c0_6 = arith.constant 0 : index
    %c0_7 = arith.constant 0 : index
    %9 = vector.load %arg4[%c0_6, %c0_7] : memref<32x32xbf16, #tpu.memory_space<vmem>>, vector<32x32xbf16>
    %10 = arith.truncf %8 : vector<32x128xf32> to vector<32x128xbf16>
    %cst_8 = arith.constant dense<0.000000e+00> : vector<32x128xf32>
    %11 = tpu.matmul %9, %10, %cst_8 {dimension_numbers = #tpu.dot_dimension_numbers<[1], [0], [0], [1], [0, 0, 1, 1], [], []>} : vector<32x32xbf16>, vector<32x128xbf16>, vector<32x128xf32> -> vector<32x128xf32>
    %c0_9 = arith.constant 0 : index
    %c0_10 = arith.constant 0 : index
    %12 = vector.load %arg5[%c0_9, %c0_10] : memref<32x1xf32, #tpu.memory_space<vmem>>, vector<32x1xf32>
    %13 = vector.broadcast %12 : vector<32x1xf32> to vector<32x128xf32>
    %14 = arith.addf %11, %13 : vector<32x128xf32>
    %cst_11 = arith.constant 0.000000e+00 : f32
    %15 = vector.broadcast %cst_11 : f32 to vector<32x128xf32>
    %16 = arith.maximumf %14, %15 : vector<32x128xf32>
    %c0_12 = arith.constant 0 : index
    %c0_13 = arith.constant 0 : index
    %17 = vector.load %arg6[%c0_12, %c0_13] : memref<32x1xf32, #tpu.memory_space<vmem>>, vector<32x1xf32>
    %18 = vector.broadcast %17 : vector<32x1xf32> to vector<32x128xf32>
    %19 = arith.mulf %16, %18 : vector<32x128xf32>
    %cst_14 = arith.constant dense<0.000000e+00> : vector<128xf32>
    %20 = vector.multi_reduction <add>, %19, %cst_14 [0] : vector<32x128xf32> to vector<128xf32>
    %21 = vector.shape_cast %20 : vector<128xf32> to vector<1x128xf32>
    %c0_15 = arith.constant 0 : index
    %c0_16 = arith.constant 0 : index
    %22 = memref.load %arg7[%c0_15, %c0_16] : memref<1x1xf32, #tpu.memory_space<smem>>
    %23 = vector.broadcast %22 : f32 to vector<1x128xf32>
    %24 = arith.addf %21, %23 : vector<1x128xf32>
    %c0_17 = arith.constant 0 : index
    %c0_18 = arith.constant 0 : index
    %25 = vector.load %arg8[%c0_17, %c0_18] : memref<1x128xf32, #tpu.memory_space<vmem>>, vector<1x128xf32>
    tpu.vector_store %arg8[%c0_17, %c0_18], %24 {strides = array<i32>} : memref<1x128xf32, #tpu.memory_space<vmem>>, vector<1x128xf32>,
    return
  }
  func.func @transform_0(%arg0: i32) -> (i32, i32) {
    %c0_i32 = arith.constant 0 : i32
    %c0_i32_0 = arith.constant 0 : i32
    return %c0_i32, %arg0 : i32, i32
  }
  func.func @transform_1(%arg0: i32) -> (i32, i32) {
    %c0_i32 = arith.constant 0 : i32
    %c0_i32_0 = arith.constant 0 : i32
    %c0_i32_1 = arith.constant 0 : i32
    return %c0_i32, %c0_i32_0 : i32, i32
  }
  func.func @transform_2(%arg0: i32) -> (i32, i32) {
    %c0_i32 = arith.constant 0 : i32
    %c0_i32_0 = arith.constant 0 : i32
    %c0_i32_1 = arith.constant 0 : i32
    return %c0_i32, %c0_i32_0 : i32, i32
  }
  func.func @transform_3(%arg0: i32) -> (i32, i32) {
    %c0_i32 = arith.constant 0 : i32
    %c0_i32_0 = arith.constant 0 : i32
    %c0_i32_1 = arith.constant 0 : i32
    return %c0_i32, %c0_i32_0 : i32, i32
  }
  func.func @transform_4(%arg0: i32) -> (i32, i32) {
    %c0_i32 = arith.constant 0 : i32
    %c0_i32_0 = arith.constant 0 : i32
    %c0_i32_1 = arith.constant 0 : i32
    return %c0_i32, %c0_i32_0 : i32, i32
  }
  func.func @transform_5(%arg0: i32) -> (i32, i32) {
    %c0_i32 = arith.constant 0 : i32
    %c0_i32_0 = arith.constant 0 : i32
    %c0_i32_1 = arith.constant 0 : i32
    return %c0_i32, %c0_i32_0 : i32, i32
  }
  func.func @transform_6(%arg0: i32) -> (i32, i32) {
    %c0_i32 = arith.constant 0 : i32
    %c0_i32_0 = arith.constant 0 : i32
    %c0_i32_1 = arith.constant 0 : i32
    return %c0_i32, %c0_i32_0 : i32, i32
  }
  func.func @transform_7(%arg0: i32) -> (i32, i32) {
    %c0_i32 = arith.constant 0 : i32
    %c0_i32_0 = arith.constant 0 : i32
    return %c0_i32, %arg0 : i32, i32
  }
}

</mosaic_0001>

<llo_original>
// kernel: value_network_forward.1
$region0: #{value_network_forward.1}
  #allocation0 [shape = 'u32[]', space=smem, size = 0x4, offset = 0x4, fixed_abs, tag = 'smem constant byte address 0x4 - core index']
  #allocation1 [shape = 'u32[144,128]{1,0:T(1,128)}', space=vmem, size = 0x12000, scoped, tag = 'internal scratch']
  #allocation2 [shape = 'f32[1,1]{1,0:T(1,128)S(6)}', space=smem, size = 0x200, scoped, tag = 'scoped memory for value_network_forward.1']
  %s0 = inlined_call_operand.vmem [shape: f32[8,128], index: 0, kind: input, shape index: {}]
  %s1 = inlined_call_operand.vmem [shape: bf16[32,8], index: 1, kind: input, shape index: {}]
  %s2 = inlined_call_operand.vmem [shape: f32[32,1], index: 2, kind: input, shape index: {}]
  %s3 = inlined_call_operand.vmem [shape: bf16[32,32], index: 3, kind: input, shape index: {}]
  %s4 = inlined_call_operand.vmem [shape: f32[32,1], index: 4, kind: input, shape index: {}]
  %s5 = inlined_call_operand.vmem [shape: f32[32,1], index: 5, kind: input, shape index: {}]
  %s6 = inlined_call_operand.<no memory space> [shape: f32[1,1], index: 6, kind: input, shape index: {}]
  %s7 = inlined_call_operand.vmem [shape: f32[1,128], index: 7, kind: output, shape index: {}]
  %s8 = sld [smem:[#allocation0]]
  $region38: #{value_network_forward.1} parent=0
    _
  %s10 = ssub.s32 1, %s8
  %s11 = scalar_select 0, %s10, %s8
  %12 = sst [smem:[#allocation2]] %s6
  // Predicated region
  $region2: #{value_network_forward.1} parent=0 // pred_check
    _
  $region3: #{value_network_forward.1} parent=0 // pred_check_branch
    %14 = sbr.rel (0) target = $region5
  $region4: #{value_network_forward.1} parent=0 // pred_region
    _
  $region5: #{value_network_forward.1} parent=0 // pred_fallthru
    _
  // Predicated region
  $region6: #{value_network_forward.1} parent=0 // pred_check
    _
  $region7: #{value_network_forward.1} parent=0 // pred_check_branch
    %16 = sbr.rel (0) target = $region9
  $region8: #{value_network_forward.1} parent=0 // pred_region
    _
  $region9: #{value_network_forward.1} parent=0 // pred_fallthru
    _
  // Predicated region
  $region10: #{value_network_forward.1} parent=0 // pred_check
    _
  $region11: #{value_network_forward.1} parent=0 // pred_check_branch
    %18 = sbr.rel (0) target = $region13
  $region12: #{value_network_forward.1} parent=0 // pred_region
    _
  $region13: #{value_network_forward.1} parent=0 // pred_fallthru
    _
  // Predicated region
  $region14: #{value_network_forward.1} parent=0 // pred_check
    _
  $region15: #{value_network_forward.1} parent=0 // pred_check_branch
    %20 = sbr.rel (0) target = $region17
  $region16: #{value_network_forward.1} parent=0 // pred_region
    _
  $region17: #{value_network_forward.1} parent=0 // pred_fallthru
    _
  // Predicated region
  $region18: #{value_network_forward.1} parent=0 // pred_check
    _
  $region19: #{value_network_forward.1} parent=0 // pred_check_branch
    %22 = sbr.rel (0) target = $region21
  $region20: #{value_network_forward.1} parent=0 // pred_region
    _
  $region21: #{value_network_forward.1} parent=0 // pred_fallthru
    _
  // Predicated region
  $region22: #{value_network_forward.1} parent=0 // pred_check
    _
  $region23: #{value_network_forward.1} parent=0 // pred_check_branch
    %24 = sbr.rel (0) target = $region25
  $region24: #{value_network_forward.1} parent=0 // pred_region
    _
  $region25: #{value_network_forward.1} parent=0 // pred_fallthru
    _
  // Predicated region
  $region26: #{value_network_forward.1} parent=0 // pred_check
    _
  $region27: #{value_network_forward.1} parent=0 // pred_check_branch
    %26 = sbr.rel (0) target = $region29
  $region28: #{value_network_forward.1} parent=0 // pred_region
    _
  $region29: #{value_network_forward.1} parent=0 // pred_fallthru
    _
  %v28 = vld [vmem:[%s0] sm:$0xff]
  %v29 = vpack.c.bf16 %v28, %v28
  %v30 = vld [vmem:[%s1] sm:$0xf]
  %v31 = vld [vmem:[%s1 + $0x4] sm:$0xf]
  %v32 = vld [vmem:[%s1 + $0x8] sm:$0xf]
  %v33 = vld [vmem:[%s1 + $0xc] sm:$0xf]
  %v34 = vld [vmem:[%s2] sm:$0xff]
  %v35 = vld [vmem:[%s2 + $0x8] sm:$0xff]
  %v36 = vld [vmem:[%s2 + $0x10] sm:$0xff]
  %v37 = vld [vmem:[%s2 + $0x18] sm:$0xff]
  %39 = vset.pattern.permute.xlu0 0
  %40 = vperm.xlu0 %39, %v34
  %v41 = vpop.permute.xlu0 %40
  %44 = vset.pattern.permute.xlu0 0
  %45 = vperm.xlu0 %44, %v35
  %v46 = vpop.permute.xlu0 %45
  %49 = vset.pattern.permute.xlu0 0
  %50 = vperm.xlu0 %49, %v36
  %v51 = vpop.permute.xlu0 %50
  %54 = vset.pattern.permute.xlu0 0
  %55 = vperm.xlu0 %54, %v37
  %v56 = vpop.permute.xlu0 %55
  %v62 = vunpack.c.l.b16 %v30
  %v63 = vunpack.c.l.b16 %v31
  %v64 = vunpack.c.l.b16 %v32
  %v65 = vunpack.c.l.b16 %v33
  %v66 = vpack.c.b16 %v63, %v62
  %v67 = vpack.c.b16 %v65, %v64
  %vm68 = vcmask 64512
  %v70 = vsel %vm68, %v66, 0
  %v73 = vsel %vm68, %v67, 0
  %vm75 = vcmask 1043456
  %v77 = vsel %vm75, %v29, 0
  %79 = vmatprep.subr.bf16.mxu0 0
  %80 = vmatpush1.bf16.msra.mxu0 0
  %81 = vmatprep.subr.bf16.mxu0 0
  %82 = vmatpush1.bf16.msra.mxu0 0
  %83 = vmatprep.subr.bf16.mxu0 0
  %84 = vmatpush1.bf16.msra.mxu0 0
  %85 = vmatprep.subr.bf16.mxu0 0
  %86 = vmatpush1.bf16.msra.mxu0 0
  %87 = vmatprep.subr.bf16.mxu0 0
  %88 = vmatpush1.bf16.msra.mxu0 0
  %89 = vmatprep.subr.bf16.mxu0 0
  %90 = vmatpush1.bf16.msra.mxu0 0
  %91 = vmatprep.subr.bf16.mxu0 0
  %92 = vmatpush1.bf16.msra.mxu0 0
  %93 = vmatprep.subr.bf16.mxu0 0
  %94 = vmatpush1.bf16.msra.mxu0 %v77
  %95 = vmatprep.subr.bf16.mxu0 0
  %96 = vmatpush2.bf16.msra.mxu0 0
  %97 = vmatprep.subr.bf16.mxu0 0
  %98 = vmatpush2.bf16.msra.mxu0 0
  %99 = vmatprep.subr.bf16.mxu0 0
  %100 = vmatpush2.bf16.msra.mxu0 0
  %101 = vmatprep.subr.bf16.mxu0 0
  %102 = vmatpush2.bf16.msra.mxu0 0
  %103 = vmatprep.subr.bf16.mxu0 0
  %104 = vmatpush2.bf16.msra.mxu0 0
  %105 = vmatprep.subr.bf16.mxu0 0
  %106 = vmatpush2.bf16.msra.mxu0 0
  %107 = vmatprep.subr.bf16.mxu0 0
  %108 = vmatpush2.bf16.msra.mxu0 0
  %109 = vmatprep.subr.bf16.mxu0 0
  %110 = vmatpush2.bf16.msra.mxu0 0
  %111 = vmatprep.mubr.bf16.mxu0 0
  %112 = vmatmul.mubr.bf16.gmra.mxu0 %v70
  %v113 = vpop.f32.mrf.mxu0
  %v114 = vadd.f32 %v41, %v113
  %v115 = vpop.f32.mrf.mxu0
  %v116 = vpop.f32.mrf.mxu0
  %v117 = vadd.f32 %v46, %v116
  %v118 = vpop.f32.mrf.mxu0
  %119 = vmatprep.mubr.bf16.mxu0 0
  %120 = vmatmul.mubr.bf16.gmra.mxu0 %v73
  %v121 = vpop.f32.mrf.mxu0
  %v122 = vadd.f32 %v51, %v121
  %v123 = vpop.f32.mrf.mxu0
  %v124 = vpop.f32.mrf.mxu0
  %v125 = vadd.f32 %v56, %v124
  %v126 = vpop.f32.mrf.mxu0
  %127 = vdwg.mxu0
  %v128 = vmax.f32 %v114, 0.0
  %v129 = vmax.f32 %v117, 0.0
  %v130 = vmax.f32 %v122, 0.0
  %v131 = vmax.f32 %v125, 0.0
  %v132 = vld [vmem:[%s3] sm:$0xf]
  %v133 = vld [vmem:[%s3 + $0x4] sm:$0xf]
  %v134 = vld [vmem:[%s3 + $0x8] sm:$0xf]
  %v135 = vld [vmem:[%s3 + $0xc] sm:$0xf]
  %v136 = vpack.c.bf16 %v129, %v128
  %v137 = vpack.c.bf16 %v131, %v130
  %v138 = vld [vmem:[%s4] sm:$0xff]
  %v139 = vld [vmem:[%s4 + $0x8] sm:$0xff]
  %v140 = vld [vmem:[%s4 + $0x10] sm:$0xff]
  %v141 = vld [vmem:[%s4 + $0x18] sm:$0xff]
  %143 = vset.pattern.permute.xlu0 0
  %144 = vperm.xlu0 %143, %v138
  %v145 = vpop.permute.xlu0 %144
  %148 = vset.pattern.permute.xlu0 0
  %149 = vperm.xlu0 %148, %v139
  %v150 = vpop.permute.xlu0 %149
  %153 = vset.pattern.permute.xlu0 0
  %154 = vperm.xlu0 %153, %v140
  %v155 = vpop.permute.xlu0 %154
  %158 = vset.pattern.permute.xlu0 0
  %159 = vperm.xlu0 %158, %v141
  %v160 = vpop.permute.xlu0 %159
  %v166 = vunpack.c.l.b16 %v132
  %v167 = vunpack.c.l.b16 %v133
  %v168 = vunpack.c.l.b16 %v134
  %v169 = vunpack.c.l.b16 %v135
  %v170 = vpack.c.b16 %v167, %v166
  %v171 = vpack.c.b16 %v169, %v168
  %vm172 = vcmask 261120
  %v174 = vsel %vm172, %v170, 0
  %v177 = vsel %vm172, %v171, 0
  %179 = vmatprep.subr.bf16.mxu0 0
  %180 = vmatpush1.bf16.msra.mxu0 0
  %181 = vmatprep.subr.bf16.mxu0 0
  %182 = vmatpush1.bf16.msra.mxu0 0
  %183 = vmatprep.subr.bf16.mxu0 0
  %184 = vmatpush1.bf16.msra.mxu0 0
  %185 = vmatprep.subr.bf16.mxu0 0
  %186 = vmatpush1.bf16.msra.mxu0 0
  %187 = vmatprep.subr.bf16.mxu0 0
  %188 = vmatpush1.bf16.msra.mxu0 0
  %189 = vmatprep.subr.bf16.mxu0 0
  %190 = vmatpush1.bf16.msra.mxu0 0
  %191 = vmatprep.subr.bf16.mxu0 0
  %192 = vmatpush1.bf16.msra.mxu0 %v137
  %193 = vmatprep.subr.bf16.mxu0 0
  %194 = vmatpush1.bf16.msra.mxu0 %v136
  %195 = vmatprep.subr.bf16.mxu0 0
  %196 = vmatpush2.bf16.msra.mxu0 0
  %197 = vmatprep.subr.bf16.mxu0 0
  %198 = vmatpush2.bf16.msra.mxu0 0
  %199 = vmatprep.subr.bf16.mxu0 0
  %200 = vmatpush2.bf16.msra.mxu0 0
  %201 = vmatprep.subr.bf16.mxu0 0
  %202 = vmatpush2.bf16.msra.mxu0 0
  %203 = vmatprep.subr.bf16.mxu0 0
  %204 = vmatpush2.bf16.msra.mxu0 0
  %205 = vmatprep.subr.bf16.mxu0 0
  %206 = vmatpush2.bf16.msra.mxu0 0
  %207 = vmatprep.subr.bf16.mxu0 0
  %208 = vmatpush2.bf16.msra.mxu0 0
  %209 = vmatprep.subr.bf16.mxu0 0
  %210 = vmatpush2.bf16.msra.mxu0 0
  %211 = vmatprep.mubr.bf16.mxu0 0
  %212 = vmatmul.mubr.bf16.gmra.mxu0 %v174
  %v213 = vpop.f32.mrf.mxu0
  %v214 = vadd.f32 %v145, %v213
  %v215 = vpop.f32.mrf.mxu0
  %v216 = vpop.f32.mrf.mxu0
  %v217 = vadd.f32 %v150, %v216
  %v218 = vpop.f32.mrf.mxu0
  %219 = vmatprep.mubr.bf16.mxu0 0
  %220 = vmatmul.mubr.bf16.gmra.mxu0 %v177
  %v221 = vpop.f32.mrf.mxu0
  %v222 = vadd.f32 %v155, %v221
  %v223 = vpop.f32.mrf.mxu0
  %v224 = vpop.f32.mrf.mxu0
  %v225 = vadd.f32 %v160, %v224
  %v226 = vpop.f32.mrf.mxu0
  %227 = vdwg.mxu0
  %v228 = vmax.f32 %v214, 0.0
  %v229 = vmax.f32 %v217, 0.0
  %v230 = vmax.f32 %v222, 0.0
  %v231 = vmax.f32 %v225, 0.0
  %v232 = vld [vmem:[%s5] sm:$0xff]
  %v233 = vld [vmem:[%s5 + $0x8] sm:$0xff]
  %v234 = vld [vmem:[%s5 + $0x10] sm:$0xff]
  %v235 = vld [vmem:[%s5 + $0x18] sm:$0xff]
  %237 = vset.pattern.permute.xlu0 0
  %238 = vperm.xlu0 %237, %v232
  %v239 = vpop.permute.xlu0 %238
  %242 = vset.pattern.permute.xlu0 0
  %243 = vperm.xlu0 %242, %v233
  %v244 = vpop.permute.xlu0 %243
  %247 = vset.pattern.permute.xlu0 0
  %248 = vperm.xlu0 %247, %v234
  %v249 = vpop.permute.xlu0 %248
  %252 = vset.pattern.permute.xlu0 0
  %253 = vperm.xlu0 %252, %v235
  %v254 = vpop.permute.xlu0 %253
  %v256 = vmul.f32 %v228, %v239
  %v257 = vmul.f32 %v229, %v244
  %v258 = vmul.f32 %v230, %v249
  %v259 = vmul.f32 %v231, %v254
  %v260 = vadd.f32 %v256, %v257
  %v261 = vadd.f32 %v260, %v258
  %v262 = vadd.f32 %v261, %v259
  %v263 = vrot.slane %v262, 4
  %v264 = vadd.f32 %v262, %v263
  %v265 = vrot.slane %v264, 2
  %v266 = vadd.f32 %v264, %v265
  %v267 = vrot.slane %v266, 1
  %v268 = vadd.f32 %v266, %v267
  %s269 = sld [smem:[#allocation2]]
  %v270 = vstv %s269
  %v271 = vadd.f32 %v268, %v270
  %272 = vst [vmem:[%s7] sm:$0x1] %v271
  // Predicated region
  $region30: #{value_network_forward.1} parent=0 // pred_check
    _
  $region31: #{value_network_forward.1} parent=0 // pred_check_branch
    %274 = sbr.rel (0) target = $region33
  $region32: #{value_network_forward.1} parent=0 // pred_region
    _
  $region33: #{value_network_forward.1} parent=0 // pred_fallthru
    _
  // Predicated region
  $region34: #{value_network_forward.1} parent=0 // pred_check
    _
  $region35: #{value_network_forward.1} parent=0 // pred_check_branch
    %276 = sbr.rel (0) target = $region37
  $region36: #{value_network_forward.1} parent=0 // pred_region
    _
  $region37: #{value_network_forward.1} parent=0 // pred_fallthru
    _

</llo_original>
